<compile_context>
chip_gen: v7x
topology: tpu7x:2x2x1
jax: 0.10.0
libtpu: 0.0.40
codegen_flags: <defaults>
</compile_context>

<pallas_src>
import functools

import jax
import jax.numpy as jnp
from jax import lax
from jax.experimental import pallas as pl
from jax.experimental.pallas import tpu as pltpu


def _round_up(x, m):
    return ((x + m - 1) // m) * m


def _vmem_capacity_bytes():
    """Physical per-core VMEM; conservative 64 MiB (v7x) fallback."""
    try:
        return int(pltpu.get_tpu_info().vmem_capacity_bytes)
    except Exception:
        return 64 << 20


def _vmem_limit(need_bytes, cap_bytes):
    # `need_bytes` already includes double buffering; add fixed headroom only
    # and keep ~25% of physical VMEM for compiler-internal scratch.
    hard_cap = (cap_bytes * 3) // 4
    return int(min(hard_cap, max(need_bytes + (4 << 20), 16 << 20)))


# ---------------------------------------------------------------------------
# Kernels
# ---------------------------------------------------------------------------
def _single_module_kernel(x_ref, w_ref, b_ref, o_ref):
    """M == 1 fast path: plain tiled matmul, mask/actions ignored (PyTorch)."""
    o_ref[...] = (jnp.dot(x_ref[...], w_ref[...],
                          preferred_element_type=jnp.float32) + b_ref[...])


def _selection_resident_kernel(cnt_ref, eff_ref, x_ref, w_ref, b_ref, o_ref,
                               *, num_modules):
    """One grid step = (batch tile bt, candidate module i); W/b resident.

    cnt_ref: SMEM (num_bt * M,) int32   rows selecting module i in tile bt
    eff_ref: (TB, 1)   int32            action if active else -1
    x_ref:   (TB, DKp) bf16             input batch tile
    w_ref:   (M, DKp, DNp) bf16         full weight stack, resident in VMEM
    b_ref:   (M, 1, DNp)   f32          full bias stack, resident in VMEM
    o_ref:   (TB, DNp) f32              resident output accumulator
    """
    bt = pl.program_id(0)
    i = pl.program_id(1)

    @pl.when(i == 0)
    def _init():
        o_ref[...] = jnp.zeros_like(o_ref)

    # Skip matmul + commit entirely for modules nobody in this tile selected.
    @pl.when(cnt_ref[bt * num_modules + i] > 0)
    def _compute():
        y = jnp.dot(x_ref[...], w_ref[i],
                    preferred_element_type=jnp.float32)       # MXU, f32 acc
        y = y + b_ref[i]                                      # (TB,DNp)+(1,DNp)
        sel = eff_ref[...] == i                               # (TB, 1)
        o_ref[...] = jnp.where(sel, y, o_ref[...])


def _selection_streaming_kernel(cnt_ref, wmap_ref, eff_ref, x_ref, w_ref,
                                b_ref, o_ref, *, num_modules):
    """Fallback when the stacked weights do not fit VMEM: stream W_i per step.

    NOTE: when cnt == 0 the W/bias blocks may hold a *different* module's
    weights (the wmap dedup skips their HBM DMA) -- any compute MUST stay
    gated on cnt > 0.
    """
    bt = pl.program_id(0)
    i = pl.program_id(1)

    @pl.when(i == 0)
    def _init():
        o_ref[...] = jnp.zeros_like(o_ref)

    @pl.when(cnt_ref[bt * num_modules + i] > 0)
    def _compute():
        y = jnp.dot(x_ref[...], w_ref[...],
                    preferred_element_type=jnp.float32)
        y = y + b_ref[...]
        sel = eff_ref[...] == i
        o_ref[...] = jnp.where(sel, y, o_ref[...])


# ---------------------------------------------------------------------------
# Wrapper
# ---------------------------------------------------------------------------
def prepare_selection_params(weights, biases):
    """Pad + cast the stacked submodule parameters once.

    Callers should cache the returned dict across forward passes: rebuilding
    the padded bf16 weight stack every call can cost more HBM traffic than the
    kernel itself for small batches.
    """
    M, D_in, D_out = weights.shape
    DKp = _round_up(D_in, 128)                       # contraction dim (lanes)
    # 256-wide N tiles fill the 256x256 MXUs on v6e/v7x; 128 is enough for
    # small layers (and for v5e's 128x128 MXUs).
    DNp = _round_up(D_out, 256) if D_out > 128 else _round_up(D_out, 128)
    w_p = jnp.zeros((M, DKp, DNp), jnp.bfloat16).at[:, :D_in, :D_out].set(
        weights.astype(jnp.bfloat16))
    b_p = jnp.zeros((M, 1, DNp), jnp.float32).at[:, 0, :D_out].set(
        biases.astype(jnp.float32))
    return dict(w_p=w_p, b_p=b_p, M=M, D_in=D_in, D_out=D_out, DKp=DKp,
                DNp=DNp)


def selection_forward(xs, weights, biases, actions, mask=None, *,
                      prepared=None, force_streaming=False):
    """Pallas implementation of Selection.forward (tensor routing part).

    xs:      (B, D_in)
    weights: (M, D_in, D_out)  stacked Linear weights (synthetic submodules)
    biases:  (M, D_out)
    actions: (B,)              int
    mask:    (B,)              int/bool or None (1 = trajectory active)
    returns  ys: (B, D_out)    float32
    """
    if prepared is None:
        prepared = prepare_selection_params(weights, biases)
    w_p, b_p = prepared["w_p"], prepared["b_p"]
    M, D_in, D_out = prepared["M"], prepared["D_in"], prepared["D_out"]
    DKp, DNp = prepared["DKp"], prepared["DNp"]

    B = xs.shape[0]
    vmem_cap = _vmem_capacity_bytes()

    # Batch tile: multiple of 16 rows (bf16 sublane packing); bigger cap on
    # 128 MiB parts (v5e/v6e) to amortize per-grid-step overhead.
    tb_cap = 512 if vmem_cap >= (96 << 20) else 256
    TB = min(_round_up(max(B, 1), 16), tb_cap)
    Bp = _round_up(B, TB)
    num_bt = Bp // TB

    xs_p = jnp.zeros((Bp, DKp), jnp.bfloat16).at[:B, :D_in].set(
        xs.astype(jnp.bfloat16))

    # ---------------- M == 1: plain tiled matmul, mask ignored -------------
    if M == 1:
        need = (2 * DKp * DNp * 2 + 2 * DNp * 4
                + 2 * TB * DKp * 2 + 2 * TB * DNp * 4)
        ys_p = pl.pallas_call(
            _single_module_kernel,
            out_shape=jax.ShapeDtypeStruct((Bp, DNp), jnp.float32),
            grid_spec=pltpu.PrefetchScalarGridSpec(
                num_scalar_prefetch=0,
                grid=(num_bt,),
                in_specs=[
                    pl.BlockSpec((TB, DKp), lambda b: (b, 0)),   # xs tile
                    pl.BlockSpec((DKp, DNp), lambda b: (0, 0)),  # W0 (resident)
                    pl.BlockSpec((1, DNp), lambda b: (0, 0)),    # b0
                ],
                out_specs=pl.BlockSpec((TB, DNp), lambda b: (b, 0)),
            ),
            compiler_params=pltpu.CompilerParams(
                dimension_semantics=("parallel",),
                vmem_limit_bytes=_vmem_limit(need, vmem_cap)),
        )(xs_p, w_p[0], b_p[0])
        return ys_p[:B, :D_out]

    # ---------------- M > 1: routed selection ------------------------------
    # TODO(synk): for M >~ 4 a sorted/grouped-matmul restructure (argsort rows
    # by eff, per-module row offsets via scalar prefetch) would drop the M x
    # redundant MXU FLOPs and the per-module full-tile select commits.
    # TODO(synk): when num_bt == 1 on v7x (2 TensorCores) an extra N-parallel
    # grid axis would keep the second core busy.
    if mask is None:
        mask = jnp.ones((B,), jnp.int32)

    # Fused action/mask stream: eff = action if active else -1 (padded rows
    # also -1 -> never selected, output row stays zero).  NOTE: actions
    # outside [0, M) behave like masked rows (zero output) rather than raising
    # like PyTorch would.
    act = actions.astype(jnp.int32)
    msk = mask.astype(jnp.int32)
    eff = jnp.full((Bp,), -1, jnp.int32).at[:B].set(jnp.where(msk != 0, act, -1))
    eff2d = eff.reshape(Bp, 1)

    # Per-(batch tile, module) selection counts -> SMEM scalar prefetch.
    mod_ids = jnp.arange(M, dtype=jnp.int32)
    cnt = (eff.reshape(num_bt, TB)[:, :, None] == mod_ids[None, None, :]).sum(1)
    cnt_flat = cnt.reshape(-1).astype(jnp.int32)            # (num_bt * M,)

    # Choose resident vs streaming weights.  Resident keeps the whole bf16
    # weight stack in VMEM (constant index_map -> single HBM DMA), removing
    # the num_bt x weight re-streaming.  The stack is counted at 2x to stay
    # safe w.r.t. pipeline buffering.
    need_resident = (2 * M * DKp * DNp * 2       # W stack (bf16)
                     + 2 * M * DNp * 4           # bias stack (f32)
                     + 2 * TB * DKp * 2          # xs tile (bf16, dbl-buffered)
                     + 2 * TB * DNp * 4          # out accumulator (f32)
                     + 2 * TB * 4)               # eff
    hard_cap = (vmem_cap * 3) // 4
    use_resident = (not force_streaming) and (need_resident + (4 << 20) <= hard_cap)

    if use_resident:
        grid_spec = pltpu.PrefetchScalarGridSpec(
            num_scalar_prefetch=1,
            grid=(num_bt, M),
            in_specs=[
                pl.BlockSpec((TB, 1), lambda b, i, c: (b, 0)),          # eff
                pl.BlockSpec((TB, DKp), lambda b, i, c: (b, 0)),        # xs
                pl.BlockSpec((M, DKp, DNp), lambda b, i, c: (0, 0, 0)),  # W stack
                pl.BlockSpec((M, 1, DNp), lambda b, i, c: (0, 0, 0)),    # b stack
            ],
            out_specs=pl.BlockSpec((TB, DNp), lambda b, i, c: (b, 0)),
        )
        ys_p = pl.pallas_call(
            functools.partial(_selection_resident_kernel, num_modules=M),
            out_shape=jax.ShapeDtypeStruct((Bp, DNp), jnp.float32),
            grid_spec=grid_spec,
            compiler_params=pltpu.CompilerParams(
                dimension_semantics=("parallel", "arbitrary"),
                vmem_limit_bytes=_vmem_limit(need_resident, vmem_cap)),
        )(cnt_flat, eff2d, xs_p, w_p, b_p)
    else:
        # Streaming fallback: one module's (DKp, DNp) weight block per grid
        # step; the deduped wmap index repeats the previous non-empty module's
        # block index so empty modules issue no weight DMA at all.
        # TODO(synk): for very large D_in/D_out this block should additionally
        # be K/N-tiled so the double-buffered W block fits v7x's 64 MiB VMEM.
        flat_sel = jnp.where(cnt_flat > 0, jnp.tile(mod_ids, num_bt), -1)
        wmap_flat = lax.cummax(flat_sel, axis=0)
        first_mod = (jnp.argmax(cnt_flat > 0) % M).astype(jnp.int32)
        wmap_flat = jnp.where(wmap_flat < 0, first_mod, wmap_flat).astype(jnp.int32)

        def _w_map(b, i, c, w):
            return (w[b * M + i], 0, 0)

        need_stream = (2 * DKp * DNp * 2 + 2 * DNp * 4
                       + 2 * TB * DKp * 2 + 2 * TB * DNp * 4 + 2 * TB * 4)
        grid_spec = pltpu.PrefetchScalarGridSpec(
            num_scalar_prefetch=2,
            grid=(num_bt, M),
            in_specs=[
                pl.BlockSpec((TB, 1), lambda b, i, c, w: (b, 0)),       # eff
                pl.BlockSpec((TB, DKp), lambda b, i, c, w: (b, 0)),     # xs
                pl.BlockSpec((pl.Squeezed(), DKp, DNp), _w_map),        # W_i
                pl.BlockSpec((pl.Squeezed(), 1, DNp), _w_map),          # b_i
            ],
            out_specs=pl.BlockSpec((TB, DNp), lambda b, i, c, w: (b, 0)),
        )
        ys_p = pl.pallas_call(
            functools.partial(_selection_streaming_kernel, num_modules=M),
            out_shape=jax.ShapeDtypeStruct((Bp, DNp), jnp.float32),
            grid_spec=grid_spec,
            compiler_params=pltpu.CompilerParams(
                dimension_semantics=("parallel", "arbitrary"),
                vmem_limit_bytes=_vmem_limit(need_stream, vmem_cap)),
        )(cnt_flat, wmap_flat, eff2d, xs_p, w_p, b_p)

    return ys_p[:B, :D_out]


def _reference(xs, weights, biases, actions, mask):
    """Plain-JAX (f32) reference mirroring the PyTorch loop."""
    B = xs.shape[0]
    M, _, D_out = weights.shape
    if M == 1:
        return (xs @ weights[0] + biases[0]).astype(jnp.float32)
    ys = jnp.zeros((B, D_out), jnp.float32)
    for i in range(M):
        m = jnp.logical_and(actions == i, mask != 0)
        yi = xs @ weights[i] + biases[i]
        ys = jnp.where(m[:, None], yi, ys)
    return ys


if __name__ == "__main__":
    key = jax.random.PRNGKey(0)
    B, D_in, D_out, M = 8, 32, 32, 3   # batch, in-feat, out-feat, #submodules

    k_x, k_w, k_b, k_a, k_m = jax.random.split(key, 5)
    xs = jax.random.normal(k_x, (B, D_in), jnp.float32)
    weights = jax.random.normal(k_w, (M, D_in, D_out), jnp.float32) * 0.1
    biases = jax.random.normal(k_b, (M, D_out), jnp.float32) * 0.1
    actions = jax.random.randint(k_a, (B,), 0, M, jnp.int32)
    mask = (jax.random.uniform(k_m, (B,)) > 0.25).astype(jnp.int32)

    # Cache the padded/cast weight stack once (reusable across forward calls).
    prepared = prepare_selection_params(weights, biases)

    ys_ref = _reference(xs, weights, biases, actions, mask)

    # Resident-weights path (default for stacks that fit VMEM).
    ys = jax.block_until_ready(
        selection_forward(xs, weights, biases, actions, mask, prepared=prepared))
    assert ys.shape == (B, D_out) and ys.dtype == jnp.float32
    # Kernel uses bf16 MXU inputs (f32 accumulation) vs the f32 reference.
    assert jnp.allclose(ys, ys_ref, atol=2e-2, rtol=2e-2), "resident mismatch"

    # Streaming fallback path (used when the weight stack exceeds VMEM).
    ys_s = jax.block_until_ready(
        selection_forward(xs, weights, biases, actions, mask,
                          prepared=prepared, force_streaming=True))
    assert jnp.allclose(ys_s, ys_ref, atol=2e-2, rtol=2e-2), "streaming mismatch"

    # Single-submodule fast path (PyTorch applies module 0 to the whole batch).
    ys1 = jax.block_until_ready(
        selection_forward(xs, weights[:1], biases[:1], actions, mask))
    ys1_ref = _reference(xs, weights[:1], biases[:1],
                         jnp.zeros((B,), jnp.int32), jnp.ones((B,), jnp.int32))
    assert jnp.allclose(ys1, ys1_ref, atol=2e-2, rtol=2e-2), "M==1 mismatch"

    print("KERNEL_OK")
</pallas_src>

<mosaic_0001>
module attributes {stable_mosaic.version = 11 : i64} {
  func.func @_selection_resident_kernel(%arg0: i32, %arg1: i32, %arg2: memref<3xi32, #tpu.memory_space<smem>>, %arg3: memref<16x1xi32, #tpu.memory_space<vmem>>, %arg4: memref<16x128xbf16, #tpu.memory_space<vmem>>, %arg5: memref<3x128x128xbf16, #tpu.memory_space<vmem>>, %arg6: memref<3x1x128xf32, #tpu.memory_space<vmem>>, %arg7: memref<16x128xf32, #tpu.memory_space<vmem>>) attributes {dimension_semantics = [#tpu.dimension_semantics<parallel>, #tpu.dimension_semantics<arbitrary>], iteration_bounds = array<i64: 1, 3>, scalar_prefetch = 1 : i64, scratch_operands = 0 : i64, tpu.core_type = #tpu.core_type<tc>, window_params = [{transform_indices = @transform_0, window_bounds = array<i64: 16, 1>}, {transform_indices = @transform_1, window_bounds = array<i64: 16, 128>}, {pipeline_mode = #tpu.pipeline_mode<synchronous>, transform_indices = @transform_2, window_bounds = array<i64: 3, 128, 128>}, {pipeline_mode = #tpu.pipeline_mode<synchronous>, transform_indices = @transform_3, window_bounds = array<i64: 3, 1, 128>}, {transform_indices = @transform_4, window_bounds = array<i64: 16, 128>}]} {
    %c0_i32 = arith.constant 0 : i32
    %0 = arith.cmpi eq, %arg1, %c0_i32 : i32
    %1 = arith.extui %0 : i1 to i32
    %c0_i32_0 = arith.constant 0 : i32
    %2 = arith.cmpi ne, %1, %c0_i32_0 : i32
    scf.if %2 {
      %cst = arith.constant 0.000000e+00 : f32
      %10 = vector.broadcast %cst : f32 to vector<16x128xf32>
      %c0 = arith.constant 0 : index
      %c0_3 = arith.constant 0 : index
      %11 = vector.load %arg7[%c0, %c0_3] : memref<16x128xf32, #tpu.memory_space<vmem>>, vector<16x128xf32>
      tpu.vector_store %arg7[%c0, %c0_3], %10 {strides = array<i32>} : memref<16x128xf32, #tpu.memory_space<vmem>>, vector<16x128xf32>,
    } else {
    }
    %c3_i32 = arith.constant 3 : i32
    %3 = arith.muli %arg0, %c3_i32 : i32
    %4 = arith.addi %3, %arg1 : i32
    %5 = arith.index_cast %4 : i32 to index
    %6 = memref.load %arg2[%5] : memref<3xi32, #tpu.memory_space<smem>>
    %c0_i32_1 = arith.constant 0 : i32
    %7 = arith.cmpi sgt, %6, %c0_i32_1 : i32
    %8 = arith.extui %7 : i1 to i32
    %c0_i32_2 = arith.constant 0 : i32
    %9 = arith.cmpi ne, %8, %c0_i32_2 : i32
    scf.if %9 {
      %c0 = arith.constant 0 : index
      %c0_3 = arith.constant 0 : index
      %10 = vector.load %arg4[%c0, %c0_3] : memref<16x128xbf16, #tpu.memory_space<vmem>>, vector<16x128xbf16>
      %11 = arith.index_cast %arg1 : i32 to index
      %c0_4 = arith.constant 0 : index
      %c0_5 = arith.constant 0 : index
      %12 = vector.load %arg5[%11, %c0_4, %c0_5] : memref<3x128x128xbf16, #tpu.memory_space<vmem>>, vector<1x128x128xbf16>
      %13 = vector.shape_cast %12 : vector<1x128x128xbf16> to vector<128x128xbf16>
      %cst = arith.constant dense<0.000000e+00> : vector<16x128xf32>
      %14 = tpu.matmul %10, %13, %cst {dimension_numbers = #tpu.dot_dimension_numbers<[1], [0], [0], [1], [0, 0, 1, 1], [], []>} : vector<16x128xbf16>, vector<128x128xbf16>, vector<16x128xf32> -> vector<16x128xf32>
      %15 = arith.index_cast %arg1 : i32 to index
      %c0_6 = arith.constant 0 : index
      %c0_7 = arith.constant 0 : index
      %16 = vector.load %arg6[%15, %c0_6, %c0_7] : memref<3x1x128xf32, #tpu.memory_space<vmem>>, vector<1x1x128xf32>
      %17 = vector.shape_cast %16 : vector<1x1x128xf32> to vector<1x128xf32>
      %18 = vector.broadcast %17 : vector<1x128xf32> to vector<16x128xf32>
      %19 = arith.addf %14, %18 : vector<16x128xf32>
      %c0_8 = arith.constant 0 : index
      %c0_9 = arith.constant 0 : index
      %20 = vector.load %arg3[%c0_8, %c0_9] : memref<16x1xi32, #tpu.memory_space<vmem>>, vector<16x1xi32>
      %21 = vector.broadcast %arg1 : i32 to vector<16x1xi32>
      %22 = arith.cmpi eq, %20, %21 : vector<16x1xi32>
      %c0_10 = arith.constant 0 : index
      %c0_11 = arith.constant 0 : index
      %23 = vector.load %arg7[%c0_10, %c0_11] : memref<16x128xf32, #tpu.memory_space<vmem>>, vector<16x128xf32>
      %24 = vector.shape_cast %22 : vector<16x1xi1> to vector<16x1xi1>
      %25 = vector.broadcast %24 : vector<16x1xi1> to vector<16x128xi1>
      %26 = arith.select %25, %19, %23 : vector<16x128xi1>, vector<16x128xf32>
      %c0_12 = arith.constant 0 : index
      %c0_13 = arith.constant 0 : index
      %27 = vector.load %arg7[%c0_12, %c0_13] : memref<16x128xf32, #tpu.memory_space<vmem>>, vector<16x128xf32>
      tpu.vector_store %arg7[%c0_12, %c0_13], %26 {strides = array<i32>} : memref<16x128xf32, #tpu.memory_space<vmem>>, vector<16x128xf32>,
    } else {
    }
    return
  }
  func.func @transform_0(%arg0: i32, %arg1: i32, %arg2: memref<3xi32, #tpu.memory_space<smem>>) -> (i32, i32) {
    %c0_i32 = arith.constant 0 : i32
    %c0_i32_0 = arith.constant 0 : i32
    return %arg0, %c0_i32 : i32, i32
  }
  func.func @transform_1(%arg0: i32, %arg1: i32, %arg2: memref<3xi32, #tpu.memory_space<smem>>) -> (i32, i32) {
    %c0_i32 = arith.constant 0 : i32
    %c0_i32_0 = arith.constant 0 : i32
    return %arg0, %c0_i32 : i32, i32
  }
  func.func @transform_2(%arg0: i32, %arg1: i32, %arg2: memref<3xi32, #tpu.memory_space<smem>>) -> (i32, i32, i32) {
    %c0_i32 = arith.constant 0 : i32
    %c0_i32_0 = arith.constant 0 : i32
    %c0_i32_1 = arith.constant 0 : i32
    %c0_i32_2 = arith.constant 0 : i32
    return %c0_i32, %c0_i32_0, %c0_i32_1 : i32, i32, i32
  }
  func.func @transform_3(%arg0: i32, %arg1: i32, %arg2: memref<3xi32, #tpu.memory_space<smem>>) -> (i32, i32, i32) {
    %c0_i32 = arith.constant 0 : i32
    %c0_i32_0 = arith.constant 0 : i32
    %c0_i32_1 = arith.constant 0 : i32
    %c0_i32_2 = arith.constant 0 : i32
    return %c0_i32, %c0_i32_0, %c0_i32_1 : i32, i32, i32
  }
  func.func @transform_4(%arg0: i32, %arg1: i32, %arg2: memref<3xi32, #tpu.memory_space<smem>>) -> (i32, i32) {
    %c0_i32 = arith.constant 0 : i32
    %c0_i32_0 = arith.constant 0 : i32
    return %arg0, %c0_i32 : i32, i32
  }
}

</mosaic_0001>

<llo_original>
// kernel: tpu_custom_call.1
$region0: #{tpu_custom_call.1}
  #allocation0 [shape = 'u32[]', space=smem, size = 0x4, offset = 0x4, fixed_abs, tag = 'smem constant byte address 0x4 - core index']
  #allocation1 [shape = 'u32[144,128]{1,0:T(1,128)}', space=vmem, size = 0x12000, scoped, tag = 'internal scratch']
  #allocation2 [shape = 's32[1]{0}', space=sflag, size = 0x4, scoped, tag = 'scoped memory for tpu_custom_call.1']
  #allocation3 [shape = 'u8[512]{0}', space=smem, size = 0x200, scoped, tag = 'prefetched SMEM operand 0']
  %s0 = inlined_call_operand.vmem [shape: s32[3], index: 0, kind: input, shape index: {}]
  %s1 = inlined_call_operand.vmem [shape: s32[16,1], index: 1, kind: input, shape index: {}]
  %s2 = inlined_call_operand.vmem [shape: bf16[16,128], index: 2, kind: input, shape index: {}]
  %s3 = inlined_call_operand.hbm [shape: bf16[3,128,128], index: 3, kind: input, shape index: {}]
  %s4 = inlined_call_operand.vmem [shape: f32[3,1,128], index: 4, kind: input, shape index: {}]
  %s5 = inlined_call_operand.hbm [shape: f32[16,128], index: 5, kind: output, shape index: {}]
  %s6 = sld [smem:[#allocation0]]
  $region61: #{tpu_custom_call.1} parent=0
    _
  %s8 = ssub.s32 1, %s6
  %s9 = scalar_select 0, %s8, %s6
  %s10 = sshll.u32 %s0, 4
  %s11 = int_to_ptr.vmem [resolvable:$true] %s10
  %13 = dma.vmem_to_smem %s11, 16, [#allocation3], [#allocation2]
  %14 = dma.done [#allocation2], 16
  %15 = sfence
  $region1: #{tpu_custom_call.1} parent=0
    #allocation4 [shape = 'u8[98304]{0}', space=vmem, size = 0x18000, scoped, tag = 'input window, operand 3, single buffered']
    #allocation5 [shape = 's32[2]{0}', space=sflag, size = 0x8, scoped, tag = 'scoped memory for tpu_custom_call.1']
    #allocation6 [shape = 's32[2]{0}', space=sflag, size = 0x8, scoped, tag = 'scoped memory for tpu_custom_call.1']
    #allocation7 [shape = 'u8[8192]{0}', space=vmem, size = 0x2000, scoped, tag = 'output window, operand 0, single buffered']
    %16 = vsyncpa [#allocation5], 0
    %17 = vsyncpa [#allocation6], 0
    loop: start=0, step=1, limit=5
    $region2: #{tpu_custom_call.1} parent=1 // loop_pre_header
      _
    $region3: #{tpu_custom_call.1} parent=1 // loop_header
      %s19 = sphi 0, %s23
      %p20 = scmp.ge.s32.totalorder %s19, 5
      %s26 = sphi 0, %s38
      %s27 = sphi 0, %s34
      %s28 = sphi 0, %s26
      %s29 = sphi 0, %s27
      %s30 = sphi 0, %s28
      %s31 = sphi 0, %s29
      %s41 = sphi 0, %s43
      %s44 = sphi 0, %s41
      %s45 = sphi 0, %s44
      %s61 = sphi 0, %s45
      %s67 = sphi 0, %s69
      %s70 = sphi 0, %s67
      %s71 = sphi 0, %s70
      %s87 = sphi 0, %s71
      %s91 = sphi 0, %s91
      %s93 = sphi 0, %s91
      %s94 = sphi 0, %s93
      %s108 = sphi 0, %s94
      %s112 = sphi 0, %s112
      %s114 = sphi 0, %s112
      %s115 = sphi 0, %s114
      %s129 = sphi 0, %s115
      %s135 = sphi 0, %s137
      %s138 = sphi 0, %s135
      %s139 = sphi 0, %s138
      %s155 = sphi 0, %s139
    $region4: #{tpu_custom_call.1} parent=1 // loop_header_branch
      %22 = sbr.rel (%p20) target = $region8
    $region5: #{tpu_custom_call.1} parent=1 // loop_body
      %s24 = ssub.s32 %s19, 1
      %s25 = ssub.s32 %s19, 2
      %s32 = sadd.s32 1, %s27
      %p33 = scmp.ge.s32.totalorder %s32, 3
      %s34 = scalar_select %p33, 0, %s32
      %s35 = sadd.s32 1, %s26
      %s36 = scalar_select %p33, %s35, %s26
      %p37 = scmp.ge.s32.totalorder %s36, 1
      %s38 = scalar_select %p37, 0, %s36
      %s39 = ssub.s32 %s26, %s38
      %p40 = scmp.eq.s32.totalorder %s39, 0
      %s42 = sadd.s32 %s41, 1
      %s43 = scalar_select %p40, %s41, %s42
      %p46 = pneg %p40
      %p47 = scmp.eq.s32.totalorder %s19, 2
      %p48 = por %p46, %p47
      %p49 = scmp.ne.s32.totalorder %s41, %s44
      %p50 = scmp.eq.s32.totalorder %s19, 0
      %p51 = por %p49, %p50
      %p52 = scmp.ne.s32.totalorder %s41, %s44
      %p53 = scmp.eq.s32.totalorder %s24, 2
      %p54 = por %p52, %p53
      %p55 = scmp.ne.s32.totalorder %s44, %s45
      %p56 = scmp.eq.s32.totalorder %s24, 0
      %p57 = por %p55, %p56
      %p58 = scmp.ne.s32.totalorder %s44, %s45
      %p59 = scmp.eq.s32.totalorder %s25, 2
      %p60 = por %p58, %p59
      %p62 = scmp.ne.s32.totalorder %s45, %s61
      %p63 = scmp.eq.s32.totalorder %s25, 0
      %p64 = por %p62, %p63
      %s65 = ssub.s32 %s26, %s38
      %p66 = scmp.eq.s32.totalorder %s65, 0
      %s68 = sadd.s32 %s67, 1
      %s69 = scalar_select %p66, %s67, %s68
      %p72 = pneg %p66
      %p73 = scmp.eq.s32.totalorder %s19, 2
      %p74 = por %p72, %p73
      %p75 = scmp.ne.s32.totalorder %s67, %s70
      %p76 = scmp.eq.s32.totalorder %s19, 0
      %p77 = por %p75, %p76
      %p78 = scmp.ne.s32.totalorder %s67, %s70
      %p79 = scmp.eq.s32.totalorder %s24, 2
      %p80 = por %p78, %p79
      %p81 = scmp.ne.s32.totalorder %s70, %s71
      %p82 = scmp.eq.s32.totalorder %s24, 0
      %p83 = por %p81, %p82
      %p84 = scmp.ne.s32.totalorder %s70, %s71
      %p85 = scmp.eq.s32.totalorder %s25, 2
      %p86 = por %p84, %p85
      %p88 = scmp.ne.s32.totalorder %s71, %s87
      %p89 = scmp.eq.s32.totalorder %s25, 0
      %p90 = por %p88, %p89
      %s92 = sadd.s32 %s91, 1
      %p95 = scmp.eq.s32.totalorder %s19, 2
      %p96 = scmp.ne.s32.totalorder %s91, %s93
      %p97 = scmp.eq.s32.totalorder %s19, 0
      %p98 = por %p96, %p97
      %p99 = scmp.ne.s32.totalorder %s91, %s93
      %p100 = scmp.eq.s32.totalorder %s24, 2
      %p101 = por %p99, %p100
      %p102 = scmp.ne.s32.totalorder %s93, %s94
      %p103 = scmp.eq.s32.totalorder %s24, 0
      %p104 = por %p102, %p103
      %p105 = scmp.ne.s32.totalorder %s93, %s94
      %p106 = scmp.eq.s32.totalorder %s25, 2
      %p107 = por %p105, %p106
      %p109 = scmp.ne.s32.totalorder %s94, %s108
      %p110 = scmp.eq.s32.totalorder %s25, 0
      %p111 = por %p109, %p110
      %s113 = sadd.s32 %s112, 1
      %p116 = scmp.eq.s32.totalorder %s19, 2
      %p117 = scmp.ne.s32.totalorder %s112, %s114
      %p118 = scmp.eq.s32.totalorder %s19, 0
      %p119 = por %p117, %p118
      %p120 = scmp.ne.s32.totalorder %s112, %s114
      %p121 = scmp.eq.s32.totalorder %s24, 2
      %p122 = por %p120, %p121
      %p123 = scmp.ne.s32.totalorder %s114, %s115
      %p124 = scmp.eq.s32.totalorder %s24, 0
      %p125 = por %p123, %p124
      %p126 = scmp.ne.s32.totalorder %s114, %s115
      %p127 = scmp.eq.s32.totalorder %s25, 2
      %p128 = por %p126, %p127
      %p130 = scmp.ne.s32.totalorder %s115, %s129
      %p131 = scmp.eq.s32.totalorder %s25, 0
      %p132 = por %p130, %p131
      %s133 = ssub.s32 %s26, %s38
      %p134 = scmp.eq.s32.totalorder %s133, 0
      %s136 = sadd.s32 %s135, 1
      %s137 = scalar_select %p134, %s135, %s136
      %p140 = pneg %p134
      %p141 = scmp.eq.s32.totalorder %s19, 2
      %p142 = por %p140, %p141
      %p143 = scmp.ne.s32.totalorder %s135, %s138
      %p144 = scmp.eq.s32.totalorder %s19, 0
      %p145 = por %p143, %p144
      %p146 = scmp.ne.s32.totalorder %s135, %s138
      %p147 = scmp.eq.s32.totalorder %s24, 2
      %p148 = por %p146, %p147
      %p149 = scmp.ne.s32.totalorder %s138, %s139
      %p150 = scmp.eq.s32.totalorder %s24, 0
      %p151 = por %p149, %p150
      %p152 = scmp.ne.s32.totalorder %s138, %s139
      %p153 = scmp.eq.s32.totalorder %s25, 2
      %p154 = por %p152, %p153
      %p156 = scmp.ne.s32.totalorder %s139, %s155
      %p157 = scmp.eq.s32.totalorder %s25, 0
      %p158 = por %p156, %p157
      %p159 = scmp.le.s32.totalorder 1, %s19
      %p160 = scmp.lt.s32.totalorder %s19, 4
      %p161 = pnand %p159, %p160
      %p162 = pneg %p161
      // Predicated region
      $region9: #{tpu_custom_call.1} parent=5 // pred_check
        _
      $region10: #{tpu_custom_call.1} parent=5 // pred_check_branch
        %164 = sbr.rel (%p161) target = $region12
      $region11: #{tpu_custom_call.1} parent=5 // pred_region
        %s165 = ssub.s32 %s19, 1
        // Predicated region
        $region13: #{tpu_custom_call.1} parent=11 // pred_check
          %p166 = pneg %p57
        $region14: #{tpu_custom_call.1} parent=11 // pred_check_branch
          %168 = sbr.rel (%p166) target = $region16
        $region15: #{tpu_custom_call.1} parent=11 // pred_region
          %s169 = smul.u32 2, %s28
          %p170 = scmp.lt.s32.totalorder %s169, 1
          %s171 = scalar_select %p170, %s169, 1
          %s172 = smul.addr %s171, 8
          %s173 = scalar_lea.vmem %s1, %s172
          %s174 = smul.u32 2, %s28
        $region16: #{tpu_custom_call.1} parent=11 // pred_fallthru
          _
        // Predicated region
        $region17: #{tpu_custom_call.1} parent=11 // pred_check
          %p175 = pneg %p83
        $region18: #{tpu_custom_call.1} parent=11 // pred_check_branch
          %177 = sbr.rel (%p175) target = $region20
        $region19: #{tpu_custom_call.1} parent=11 // pred_region
          %s178 = smul.u32 2, %s28
          %p179 = scmp.lt.s32.totalorder %s178, 1
          %s180 = scalar_select %p179, %s178, 1
          %s181 = smul.addr %s180, 4
          %s182 = scalar_lea.vmem %s2, %s181
          %s183 = smul.u32 2, %s28
        $region20: #{tpu_custom_call.1} parent=11 // pred_fallthru
          _
        // Predicated region
        $region21: #{tpu_custom_call.1} parent=11 // pred_check
          %p184 = pneg %p104
        $region22: #{tpu_custom_call.1} parent=11 // pred_check_branch
          %186 = sbr.rel (%p184) target = $region24
        $region23: #{tpu_custom_call.1} parent=11 // pred_region
          %s188 = ssub.s32 3072, 3072
          %189 = vsyncadd [#allocation5], %s188
          %s190 = sshll.u32 [#allocation4], 4
          %s191 = int_to_ptr.vmem [resolvable:$true] %s190
          %196 = dma.hbm_to_vmem [thread:$0]  %s3, 3072, %s191, [#allocation5], 64, 64, 4
        $region24: #{tpu_custom_call.1} parent=11 // pred_fallthru
          _
        // Predicated region
        $region25: #{tpu_custom_call.1} parent=11 // pred_check
          %p197 = pneg %p125
        $region26: #{tpu_custom_call.1} parent=11 // pred_check_branch
          %199 = sbr.rel (%p197) target = $region28
        $region27: #{tpu_custom_call.1} parent=11 // pred_region
          _
        $region28: #{tpu_custom_call.1} parent=11 // pred_fallthru
          _
      $region12: #{tpu_custom_call.1} parent=5 // pred_fallthru
        _
      %p200 = scmp.lt.s32.totalorder %s19, 3
      // Predicated region
      $region29: #{tpu_custom_call.1} parent=5 // pred_check
        %p201 = pneg %p200
      $region30: #{tpu_custom_call.1} parent=5 // pred_check_branch
        %203 = sbr.rel (%p201) target = $region32
      $region31: #{tpu_custom_call.1} parent=5 // pred_region
        _
      $region32: #{tpu_custom_call.1} parent=5 // pred_fallthru
        _
      %p204 = scmp.le.s32.totalorder 1, %s19
      %p205 = scmp.lt.s32.totalorder %s19, 4
      %p206 = pnand %p204, %p205
      %p207 = pneg %p206
      // Predicated region
      $region33: #{tpu_custom_call.1} parent=5 // pred_check
        _
      $region34: #{tpu_custom_call.1} parent=5 // pred_check_branch
        %209 = sbr.rel (%p206) target = $region36
      $region35: #{tpu_custom_call.1} parent=5 // pred_region
        %s210 = ssub.s32 %s19, 1
        // Predicated region
        $region37: #{tpu_custom_call.1} parent=35 // pred_check
          %p211 = pneg %p104
        $region38: #{tpu_custom_call.1} parent=35 // pred_check_branch
          %213 = sbr.rel (%p211) target = $region40
        $region39: #{tpu_custom_call.1} parent=35 // pred_region
          %214 = dma.done [#allocation5], 3072
        $region40: #{tpu_custom_call.1} parent=35 // pred_fallthru
          _
        %s215 = smul.u32 2, %s28
        %p216 = scmp.lt.s32.totalorder %s215, 1
        %s217 = scalar_select %p216, %s215, 1
        %s218 = smul.addr %s217, 8
        %s219 = scalar_lea.vmem %s1, %s218
        %p220 = pneg %p57
        %p221 = pneg %p54
        %s222 = smul.u32 2, %s28
        %p223 = scmp.lt.s32.totalorder %s222, 1
        %s224 = scalar_select %p223, %s222, 1
        %s225 = smul.addr %s224, 4
        %s226 = scalar_lea.vmem %s2, %s225
        %p227 = pneg %p83
        %p228 = pneg %p80
        %p229 = pneg %p104
        %p230 = pneg %p101
        %p231 = pneg %p125
        %p232 = pneg %p122
        %p233 = pneg %p151
        %p234 = pneg %p148
        %s235 = smul.u32 2, %s28
        %p236 = scmp.lt.s32.totalorder %s235, 1
        %s237 = scalar_select %p236, %s235, 1
        %s238 = smul.addr %s237, 8
        %s239 = scalar_lea.vmem %s1, %s238
        %s240 = smul.u32 2, %s28
        %s241 = smul.u32 2, %s28
        %p242 = scmp.lt.s32.totalorder %s241, 1
        %s243 = scalar_select %p242, %s241, 1
        %s244 = smul.addr %s243, 4
        %s245 = scalar_lea.vmem %s2, %s244
        %s246 = smul.u32 2, %s28
        %s247 = smul.u32 2, %s28
        %p249 = scmp.eq.s32.totalorder %s29, 0
        // Predicated region
        $region41: #{tpu_custom_call.1} parent=35 // pred_check
          %p250 = pneg %p249
        $region42: #{tpu_custom_call.1} parent=35 // pred_check_branch
          %252 = sbr.rel (%p250) target = $region44
        $region43: #{tpu_custom_call.1} parent=35 // pred_region
          %253 = vst [vmem:[#allocation7] sm:$0xff] 0.0
          %254 = vst [vmem:[#allocation7 + $0x8] sm:$0xff] 0.0
        $region44: #{tpu_custom_call.1} parent=35 // pred_fallthru
          _
        %s255 = smul.u32 %s28, 3
        %s256 = sadd.s32 %s255, %s29
        %s257 = sld [smem:[#allocation3 + %s256]]
        %p258 = scmp.gt.s32.totalorder %s257, 0
        // Predicated region
        $region45: #{tpu_custom_call.1} parent=35 // pred_check
          %p259 = pneg %p258
        $region46: #{tpu_custom_call.1} parent=35 // pred_check_branch
          %261 = sbr.rel (%p259) target = $region48
        $region47: #{tpu_custom_call.1} parent=35 // pred_region
          %v262 = vld [vmem:[%s245] sm:$0xf]
          %v263 = vld [vmem:[%s245 + $0x4] sm:$0xf]
          %s264 = smul.u32 %s29, 16
          %s265 = smul.addr %s264, 4
          %s266 = scalar_lea.vmem [#allocation4], %s265
          %v267 = vld [vmem:[%s266] sm:$0xf]
          %v268 = vld [vmem:[%s266 + $0x4] sm:$0xf]
          %v269 = vld [vmem:[%s266 + $0x8] sm:$0xf]
          %v270 = vld [vmem:[%s266 + $0xc] sm:$0xf]
          %v271 = vld [vmem:[%s266 + $0x10] sm:$0xf]
          %v272 = vld [vmem:[%s266 + $0x14] sm:$0xf]
          %v273 = vld [vmem:[%s266 + $0x18] sm:$0xf]
          %v274 = vld [vmem:[%s266 + $0x1c] sm:$0xf]
          %v275 = vld [vmem:[%s266 + $0x20] sm:$0xf]
          %v276 = vld [vmem:[%s266 + $0x24] sm:$0xf]
          %v277 = vld [vmem:[%s266 + $0x28] sm:$0xf]
          %v278 = vld [vmem:[%s266 + $0x2c] sm:$0xf]
          %v279 = vld [vmem:[%s266 + $0x30] sm:$0xf]
          %v280 = vld [vmem:[%s266 + $0x34] sm:$0xf]
          %v281 = vld [vmem:[%s266 + $0x38] sm:$0xf]
          %v282 = vld [vmem:[%s266 + $0x3c] sm:$0xf]
          %s283 = scalar_lea.vmem %s4, %s29
          %v284 = vld [vmem:[%s283] sm:$0x1]
          %v286 = vlaneseq
          %v287 = vshrl.u32 %v286, 7
          %v288 = vsub.s32 0, %v287
          %v289 = vrot.slane %v284, %v288
          %v293 = vunpack.c.l.b16 %v262
          %v294 = vunpack.c.l.b16 %v263
          %v295 = vpack.c.b16 %v294, %v293
          %v313 = vunpack.c.l.b16 %v267
          %v314 = vunpack.c.l.b16 %v268
          %v315 = vunpack.c.l.b16 %v269
          %v316 = vunpack.c.l.b16 %v270
          %v317 = vunpack.c.l.b16 %v271
          %v318 = vunpack.c.l.b16 %v272
          %v319 = vunpack.c.l.b16 %v273
          %v320 = vunpack.c.l.b16 %v274
          %v321 = vunpack.c.l.b16 %v275
          %v322 = vunpack.c.l.b16 %v276
          %v323 = vunpack.c.l.b16 %v277
          %v324 = vunpack.c.l.b16 %v278
          %v325 = vunpack.c.l.b16 %v279
          %v326 = vunpack.c.l.b16 %v280
          %v327 = vunpack.c.l.b16 %v281
          %v328 = vunpack.c.l.b16 %v282
          %v329 = vpack.c.b16 %v314, %v313
          %v330 = vpack.c.b16 %v316, %v315
          %v331 = vpack.c.b16 %v318, %v317
          %v332 = vpack.c.b16 %v320, %v319
          %v333 = vpack.c.b16 %v322, %v321
          %v334 = vpack.c.b16 %v324, %v323
          %v335 = vpack.c.b16 %v326, %v325
          %v336 = vpack.c.b16 %v328, %v327
          %345 = vmatprep.subr.bf16.mxu0 0
          %346 = vmatpush1.bf16.msra.mxu0 %v329
          %347 = vmatprep.subr.bf16.mxu0 0
          %348 = vmatpush1.bf16.msra.mxu0 %v330
          %349 = vmatprep.subr.bf16.mxu0 0
          %350 = vmatpush1.bf16.msra.mxu0 %v331
          %351 = vmatprep.subr.bf16.mxu0 0
          %352 = vmatpush1.bf16.msra.mxu0 %v332
          %353 = vmatprep.subr.bf16.mxu0 0
          %354 = vmatpush1.bf16.msra.mxu0 %v333
          %355 = vmatprep.subr.bf16.mxu0 0
          %356 = vmatpush1.bf16.msra.mxu0 %v334
          %357 = vmatprep.subr.bf16.mxu0 0
          %358 = vmatpush1.bf16.msra.mxu0 %v335
          %359 = vmatprep.subr.bf16.mxu0 0
          %360 = vmatpush1.bf16.msra.mxu0 %v336
          %361 = vmatprep.subr.bf16.mxu0 0
          %362 = vmatpush1.bf16.msra.mxu0 0
          %363 = vmatprep.subr.bf16.mxu0 0
          %364 = vmatpush1.bf16.msra.mxu0 0
          %365 = vmatprep.subr.bf16.mxu0 0
          %366 = vmatpush1.bf16.msra.mxu0 0
          %367 = vmatprep.subr.bf16.mxu0 0
          %368 = vmatpush1.bf16.msra.mxu0 0
          %369 = vmatprep.subr.bf16.mxu0 0
          %370 = vmatpush1.bf16.msra.mxu0 0
          %371 = vmatprep.subr.bf16.mxu0 0
          %372 = vmatpush1.bf16.msra.mxu0 0
          %373 = vmatprep.subr.bf16.mxu0 0
          %374 = vmatpush1.bf16.msra.mxu0 0
          %375 = vmatprep.subr.bf16.mxu0 0
          %376 = vmatpush1.bf16.msra.mxu0 0
          %377 = vmatprep.mubr.bf16.mxu0 0
          %378 = vmatmul.mubr.bf16.gmra.mrb[0].mxu0 %v295
          %v379 = vpop.f32.mrb[0].mxu0
          %v380 = vadd.f32 %v289, %v379
          %v381 = vpop.f32.mrb[0].mxu0
          %v382 = vpop.f32.mrb[0].mxu0
          %v383 = vadd.f32 %v289, %v382
          %v384 = vpop.f32.mrb[0].mxu0
          %385 = vdwg.mxu0
          %v386 = vld [vmem:[%s239] sm:$0xff]
          %v387 = vld [vmem:[%s239 + $0x8] sm:$0xff]
          %v388 = vstv %s29
          %vm389 = vcmp.eq.s32.totalorder %v386, %v388
          %vm390 = vcmp.eq.s32.totalorder %v387, %v388
          %v391 = vld [vmem:[#allocation7] sm:$0xff]
          %v392 = vld [vmem:[#allocation7 + $0x8] sm:$0xff]
          %v393 = vsel %vm389, 1, 0
          %v394 = vsel %vm390, 1, 0
          %395 = vset.pattern.permute.xlu0 0
          %396 = vperm.xlu0 %395, %v393
          %v397 = vpop.permute.xlu0 %396
          %398 = vset.pattern.permute.xlu0 0
          %399 = vperm.xlu0 %398, %v394
          %v400 = vpop.permute.xlu0 %399
          %vm401 = vcmp.eq.s32.totalorder %v397, 1
          %vm402 = vcmp.eq.s32.totalorder %v400, 1
          %v403 = vsel %vm401, %v380, %v391
          %v404 = vsel %vm402, %v383, %v392
          %405 = vst [vmem:[#allocation7] sm:$0xff] %v403
          %406 = vst [vmem:[#allocation7 + $0x8] sm:$0xff] %v404
        $region48: #{tpu_custom_call.1} parent=35 // pred_fallthru
          _
        // Predicated region
        $region49: #{tpu_custom_call.1} parent=35 // pred_check
          %p407 = pneg %p148
        $region50: #{tpu_custom_call.1} parent=35 // pred_check_branch
          %409 = sbr.rel (%p407) target = $region52
        $region51: #{tpu_custom_call.1} parent=35 // pred_region
          %s410 = smul.u32 2, %s28
          %s412 = ssub.s32 256, 256
          %413 = vsyncadd [#allocation6], %s412
          %s414 = smul.addr %s410, 128
          %s415 = scalar_lea.hbm %s5, %s414
          %s416 = sshll.u32 [#allocation7], 4
          %s417 = int_to_ptr.vmem [resolvable:$true] %s416
          %422 = dma.vmem_to_hbm [thread:$0]  %s417, 256, %s415, [#allocation6], 128, 128, 8
        $region52: #{tpu_custom_call.1} parent=35 // pred_fallthru
          _
        // Predicated region
        $region53: #{tpu_custom_call.1} parent=35 // pred_check
          %p423 = pneg %p148
        $region54: #{tpu_custom_call.1} parent=35 // pred_check_branch
          %425 = sbr.rel (%p423) target = $region56
        $region55: #{tpu_custom_call.1} parent=35 // pred_region
          %426 = dma.done [#allocation6], 256
        $region56: #{tpu_custom_call.1} parent=35 // pred_fallthru
          _
      $region36: #{tpu_custom_call.1} parent=5 // pred_fallthru
        _
      %p427 = scmp.le.s32.totalorder 2, %s19
      // Predicated region
      $region57: #{tpu_custom_call.1} parent=5 // pred_check
        %p428 = pneg %p427
      $region58: #{tpu_custom_call.1} parent=5 // pred_check_branch
        %430 = sbr.rel (%p428) target = $region60
      $region59: #{tpu_custom_call.1} parent=5 // pred_region
        %s431 = ssub.s32 %s19, 2
      $region60: #{tpu_custom_call.1} parent=5 // pred_fallthru
        _
    $region6: #{tpu_custom_call.1} parent=1 // loop_footer
      %s23 = sadd.s32 1, %s19
    $region7: #{tpu_custom_call.1} parent=1 // loop_footer_branch
      %18 = sbr.rel target = $region3
    $region8: #{tpu_custom_call.1} parent=1 // loop_exit
      _
    %432 = vsyncpa [#allocation5], 1
    %s433 = scalar_lea.sflag [#allocation5], 1
    %434 = vsyncpa %s433, 1
    %435 = vsyncpa [#allocation6], 1
    %s436 = scalar_lea.sflag [#allocation6], 1
    %437 = vsyncpa %s436, 1

</llo_original>
